<compile_context>
chip_gen: v7x
topology: tpu7x:2x2x1
jax: 0.10.0
libtpu: 0.0.40
codegen_flags: <defaults>
</compile_context>

<pallas_src>
import jax
import jax.numpy as jnp
from jax.experimental import pallas as pl
from jax.experimental.pallas import tpu as pltpu

SMEM_SPEC = pl.BlockSpec(memory_space=pltpu.MemorySpace.SMEM)


def _round_up(x, m):
    return (x + m - 1) // m * m


# ---------------------------------------------------------------------------
# Kernel 1: fused per-layer weighted softmax cross-entropy
#   logits [L, N, C+1], targets [L, N, 1] (int32), weight [1, C+1]
#   grid = (L,)  -> per-layer weighted-NLL sum and weight sum (SMEM vectors)
# ---------------------------------------------------------------------------
def _fused_ce_kernel(logits_ref, tgt_ref, w_ref, nll_ref, wsum_ref):
    l = pl.program_id(0)
    logits = logits_ref[...].astype(jnp.float32)            # (N, C)
    tgt = tgt_ref[...]                                       # (N, 1) int32
    w = w_ref[...].astype(jnp.float32)                       # (1, C)
    n, c = logits.shape
    m = jnp.max(logits, axis=-1, keepdims=True)
    lse = m + jnp.log(jnp.sum(jnp.exp(logits - m), axis=-1, keepdims=True))  # (N, 1)
    cls_iota = jax.lax.broadcasted_iota(jnp.int32, (n, c), 1)
    onehot = (cls_iota == tgt).astype(jnp.float32)            # (N, C)
    tgt_logit = jnp.sum(logits * onehot, axis=-1, keepdims=True)
    w_per = jnp.sum(w * onehot, axis=-1, keepdims=True)       # (N, 1)
    nll_ref[l] = jnp.sum((lse - tgt_logit) * w_per)
    wsum_ref[l] = jnp.sum(w_per)


def fused_weighted_ce(logits, targets, weight):
    """logits [L,N,C], targets [L,N] int, weight [C] -> per-layer CE loss [L]."""
    num_l, n, c = logits.shape
    tgt = targets.astype(jnp.int32).reshape(num_l, n, 1)
    w = weight.astype(jnp.float32).reshape(1, c)
    bytes_acc = int(logits.size * logits.dtype.itemsize + tgt.size * 4 + w.size * 4
                    + 8 * num_l)
    cost = pl.CostEstimate(flops=int(6 * num_l * n * c),
                           transcendentals=int(num_l * n * (c + 1)),
                           bytes_accessed=bytes_acc)
    nll, wsum = pl.pallas_call(
        _fused_ce_kernel,
        out_shape=(jax.ShapeDtypeStruct((num_l,), jnp.float32),
                   jax.ShapeDtypeStruct((num_l,), jnp.float32)),
        grid=(num_l,),
        in_specs=[pl.BlockSpec((None, n, c), lambda l: (l, 0, 0)),
                  pl.BlockSpec((None, n, 1), lambda l: (l, 0, 0)),
                  pl.BlockSpec((1, c), lambda l: (0, 0))],
        out_specs=(SMEM_SPEC, SMEM_SPEC),
        compiler_params=pltpu.CompilerParams(dimension_semantics=("arbitrary",)),
        cost_estimate=cost,
    )(logits, tgt, w)
    return nll / jnp.maximum(wsum, jnp.float32(1e-12))   # eps guard (div-by-zero insurance)


# ---------------------------------------------------------------------------
# Kernel 2: fused per-layer sigmoid-BCE + dice on point-sampled masks
#   point_logits / point_labels: [L, Nm_pad, P]; grid = (L, row_tiles)
#   SMEM outputs: per-layer bce sum-of-row-means and per-layer dice sum
#   (the divide by num_masks happens in JAX).
# ---------------------------------------------------------------------------
def _fused_mask_kernel(logits_ref, labels_ref, bce_ref, dice_ref):
    l = pl.program_id(0)
    t = pl.program_id(1)

    @pl.when(t == 0)
    def _():
        bce_ref[l] = jnp.float32(0.0)
        dice_ref[l] = jnp.float32(0.0)

    x = logits_ref[...].astype(jnp.float32)                   # (TILE, P)
    y = labels_ref[...].astype(jnp.float32)

    # single transcendental exp, reused for BCE and sigmoid
    e = jnp.exp(-jnp.abs(x))
    bce = jnp.maximum(x, 0.0) - x * y + jnp.log1p(e)          # BCE-with-logits, stable
    r = pl.reciprocal(1.0 + e, approx=True)                   # EUP approx recip
    p = jnp.where(x >= 0.0, r, e * r)                         # sigmoid(x)

    inv_p = jnp.float32(1.0 / x.shape[-1])
    bce_ref[l] += jnp.sum(bce) * inv_p                        # sum over rows of mean over P

    numer = 2.0 * jnp.sum(p * y, axis=-1, keepdims=True)      # (TILE, 1)
    denom = jnp.sum(p, axis=-1, keepdims=True) + jnp.sum(y, axis=-1, keepdims=True)
    dloss = 1.0 - (numer + 1.0) / (denom + 1.0)
    dice_ref[l] += jnp.sum(dloss)


def fused_mask_losses(point_logits, point_labels):
    """[L,Nm,P] each -> (bce_sum [L], dice_sum [L]); caller divides by num_masks."""
    num_l, n, p = point_logits.shape
    n8 = _round_up(max(n, 1), 8)
    tile = min(n8, 128)                       # keeps double-buffered inputs << 32 MiB
    n_pad = _round_up(n8, tile)
    if n_pad != n:
        pad = n_pad - n
        # padded rows: very negative logit + zero label => contribute ~0 to both losses
        point_logits = jnp.concatenate(
            [point_logits, jnp.full((num_l, pad, p), -30.0, point_logits.dtype)], axis=1)
        point_labels = jnp.concatenate(
            [point_labels, jnp.zeros((num_l, pad, p), point_labels.dtype)], axis=1)
    n_tiles = n_pad // tile
    bytes_acc = int(point_logits.size * point_logits.dtype.itemsize
                    + point_labels.size * point_labels.dtype.itemsize + 8 * num_l)
    cost = pl.CostEstimate(flops=int(12 * num_l * n_pad * p),
                           transcendentals=int(3 * num_l * n_pad * p),
                           bytes_accessed=bytes_acc)
    bce_sum, dice_sum = pl.pallas_call(
        _fused_mask_kernel,
        out_shape=(jax.ShapeDtypeStruct((num_l,), jnp.float32),
                   jax.ShapeDtypeStruct((num_l,), jnp.float32)),
        grid=(num_l, n_tiles),
        in_specs=[pl.BlockSpec((None, tile, p), lambda l, t: (l, t, 0)),
                  pl.BlockSpec((None, tile, p), lambda l, t: (l, t, 0))],
        out_specs=(SMEM_SPEC, SMEM_SPEC),
        compiler_params=pltpu.CompilerParams(
            dimension_semantics=("arbitrary", "arbitrary")),
        cost_estimate=cost,
    )(point_logits, point_labels)
    return bce_sum, dice_sum


# ---------------------------------------------------------------------------
# Kernel 3: MSE loss — lane-dense (rows, 128) layout, row-tiled accumulation
# ---------------------------------------------------------------------------
def _mse_kernel(x_ref, y_ref, sse_ref):
    t = pl.program_id(0)

    @pl.when(t == 0)
    def _():
        sse_ref[0] = jnp.float32(0.0)

    d = x_ref[...].astype(jnp.float32) - y_ref[...].astype(jnp.float32)
    sse_ref[0] += jnp.sum(d * d)


def mse_loss(x, y):
    total = int(x.size)
    lanes = 128
    rows = pl.cdiv(total, lanes)
    rows8 = _round_up(max(rows, 1), 8)
    tile = min(rows8, 1024)
    rows_pad = _round_up(rows8, tile)
    pad = rows_pad * lanes - total
    xf = x.reshape(-1)
    yf = y.reshape(-1)
    if pad:
        xf = jnp.concatenate([xf, jnp.zeros((pad,), xf.dtype)])
        yf = jnp.concatenate([yf, jnp.zeros((pad,), yf.dtype)])
    x2 = xf.reshape(rows_pad, lanes)
    y2 = yf.reshape(rows_pad, lanes)
    n_tiles = rows_pad // tile
    bytes_acc = int(x2.size * x2.dtype.itemsize + y2.size * y2.dtype.itemsize + 4)
    cost = pl.CostEstimate(flops=int(3 * total), transcendentals=0,
                           bytes_accessed=bytes_acc)
    sse = pl.pallas_call(
        _mse_kernel,
        out_shape=jax.ShapeDtypeStruct((1,), jnp.float32),
        grid=(n_tiles,),
        in_specs=[pl.BlockSpec((tile, lanes), lambda t: (t, 0)),
                  pl.BlockSpec((tile, lanes), lambda t: (t, 0))],
        out_specs=SMEM_SPEC,
        compiler_params=pltpu.CompilerParams(dimension_semantics=("arbitrary",)),
        cost_estimate=cost,
    )(x2, y2)
    return sse[0] / jnp.float32(total)


# ---------------------------------------------------------------------------
# Criterion (glue in plain JAX; loss math inside the fused Pallas kernels)
# ---------------------------------------------------------------------------
def oracle_matcher(outputs, targets):
    # TODO(synk): true Hungarian assignment (linear_sum_assignment) has no clean
    # Pallas equivalent; this "oracle" matcher deterministically matches
    # target i <-> query i.
    indices = []
    for t in targets:
        n = int(t["labels"].shape[0])
        idx = jnp.arange(n, dtype=jnp.int32)
        indices.append((idx, idx))
    return indices


class SetCriterionMixOracle:
    def __init__(self, num_classes, matcher, weight_dict, eos_coef, losses,
                 num_points, oversample_ratio, importance_sample_ratio):
        self.num_classes = num_classes
        self.matcher = matcher
        self.weight_dict = weight_dict
        self.eos_coef = eos_coef
        self.losses = losses
        self.num_points = num_points
        self.oversample_ratio = oversample_ratio
        self.importance_sample_ratio = importance_sample_ratio
        self.empty_weight = jnp.ones((num_classes + 1,), jnp.float32).at[-1].set(eos_coef)

    # --- index permutation helpers -------------------------------------
    def _get_src_permutation_idx(self, indices):
        batch_idx = jnp.concatenate(
            [jnp.full_like(src, i) for i, (src, _) in enumerate(indices)])
        src_idx = jnp.concatenate([src for src, _ in indices])
        return batch_idx, src_idx

    def _get_tgt_permutation_idx(self, indices):
        batch_idx = jnp.concatenate(
            [jnp.full_like(tgt, i) for i, (_, tgt) in enumerate(indices)])
        tgt_idx = jnp.concatenate([tgt for _, tgt in indices])
        return batch_idx, tgt_idx

    # --- per-layer input builders (JAX glue) -----------------------------
    def _build_label_inputs(self, pred_logits, targets, indices):
        b, q, c1 = pred_logits.shape
        batch_idx, src_idx = self._get_src_permutation_idx(indices)
        target_classes_o = jnp.concatenate(
            [t["labels"][j] for t, (_, j) in zip(targets, indices)])
        target_classes = jnp.full((b, q), self.num_classes, dtype=jnp.int32)
        target_classes = target_classes.at[batch_idx, src_idx].set(
            target_classes_o.astype(jnp.int32))
        return pred_logits.reshape(b * q, c1), target_classes.reshape(b * q)

    def _build_mask_inputs(self, pred_masks, targets, indices):
        src_idx = self._get_src_permutation_idx(indices)
        tgt_idx = self._get_tgt_permutation_idx(indices)
        src_masks = pred_masks[src_idx]                                  # [Nm, H, W]
        target_masks = jnp.stack([t["masks"] for t in targets])         # [B, Nt, Ht, Wt]
        target_masks = target_masks.astype(src_masks.dtype)[tgt_idx]    # [Nm, Ht, Wt]
        n, h, w = src_masks.shape
        _, ht, wt = target_masks.shape
        if h * w > self.num_points:
            # TODO(synk): get_uncertain_point_coords_with_randomness / point_sample
            # (grid_sample) path not implemented; example shapes use the pooling branch.
            raise NotImplementedError("point-sampling branch not implemented")
        rh, rw = ht // h, wt // w
        # TODO(synk): the row gather + max-pool downsample could be fused into the
        # Pallas kernel via PrefetchScalarGridSpec row gather; kept as JAX glue.
        point_labels = target_masks.reshape(n, h, rh, w, rw).max(axis=(2, 4)).reshape(n, h * w)
        point_logits = src_masks.reshape(n, h * w)
        return point_logits, point_labels

    # --- individual losses (single-layer API, L=1 fused path) -------------
    def loss_labels(self, outputs, targets, indices, num_masks, print_logits=False):
        logits, tcls = self._build_label_inputs(outputs["pred_logits"], targets, indices)
        ce_vec = fused_weighted_ce(logits[None], tcls[None], self.empty_weight)
        return {"loss_ce": ce_vec[0]}

    def loss_masks(self, outputs, targets, indices, num_masks, print_logits=False):
        plog, plab = self._build_mask_inputs(outputs["pred_masks"], targets, indices)
        bce_sum, dice_sum = fused_mask_losses(plog[None], plab[None])
        inv_nm = 1.0 / num_masks
        return {"loss_mask": bce_sum[0] * inv_nm, "loss_dice": dice_sum[0] * inv_nm}

    def get_loss(self, loss, outputs, targets, indices, num_masks, print_logits=False):
        loss_map = {"labels": self.loss_labels, "masks": self.loss_masks}
        assert loss in loss_map, f"do you really want to compute {loss} loss?"
        return loss_map[loss](outputs, targets, indices, num_masks, print_logits)

    # --- forward: fused across main + aux layers ---------------------------
    def forward(self, outputs, targets, upsampling_targets, temperature=None):
        outputs_without_aux_up = {
            k: v for k, v in outputs.items()
            if k not in ("aux_outputs", "upsampling_outputs")
        }
        indices = self.matcher(outputs_without_aux_up, targets)
        num_masks = float(sum(int(t["labels"].shape[0]) for t in targets))
        num_masks = max(num_masks, 1.0)  # single process: world_size == 1

        # stack main output + every aux output into one [L, ...] batch per loss
        layer_suffixes = [""]
        layer_outputs = [outputs_without_aux_up]
        layer_indices = [indices]
        if "aux_outputs" in outputs:
            for i, aux in enumerate(outputs["aux_outputs"]):
                layer_suffixes.append(f"_{i}")
                layer_outputs.append(aux)
                layer_indices.append(self.matcher(aux, targets))

        losses = {}
        for loss in self.losses:
            if loss == "labels":
                logit_stack, tcls_stack = [], []
                for out, ind in zip(layer_outputs, layer_indices):
                    lg, tc = self._build_label_inputs(out["pred_logits"], targets, ind)
                    logit_stack.append(lg)
                    tcls_stack.append(tc)
                ce_vec = fused_weighted_ce(
                    jnp.stack(logit_stack), jnp.stack(tcls_stack), self.empty_weight)
                for k, sfx in enumerate(layer_suffixes):
                    losses["loss_ce" + sfx] = ce_vec[k]
            elif loss == "masks":
                plog_stack, plab_stack = [], []
                for out, ind in zip(layer_outputs, layer_indices):
                    plog, plab = self._build_mask_inputs(out["pred_masks"], targets, ind)
                    plog_stack.append(plog)
                    plab_stack.append(plab)
                bce_sum, dice_sum = fused_mask_losses(
                    jnp.stack(plog_stack), jnp.stack(plab_stack))
                inv_nm = 1.0 / num_masks
                for k, sfx in enumerate(layer_suffixes):
                    losses["loss_mask" + sfx] = bce_sum[k] * inv_nm
                    losses["loss_dice" + sfx] = dice_sum[k] * inv_nm
            else:
                raise AssertionError(f"do you really want to compute {loss} loss?")

        if "upsampling_outputs" in outputs:
            for i, (up_out, up_tgt) in enumerate(
                    zip(outputs["upsampling_outputs"], upsampling_targets)):
                losses[f"loss_upsampling_{i}"] = mse_loss(up_out, up_tgt)

        if temperature is not None:
            losses["loss_l1"] = temperature
        return losses

    __call__ = forward


# ---------------------------------------------------------------------------
if __name__ == "__main__":
    key = jax.random.PRNGKey(0)
    B, Q, K = 2, 8, 4          # batch, queries, foreground classes (logits have K+1)
    H = W = 16                 # predicted mask resolution
    Ht = Wt = 32               # target mask resolution (ratio 2 -> max_pool branch)
    NT = 3                     # targets per image

    ks = jax.random.split(key, 10)
    pred_logits = jax.random.normal(ks[0], (B, Q, K + 1), jnp.float32)
    pred_masks = jax.random.normal(ks[1], (B, Q, H, W), jnp.float32)
    aux_logits = jax.random.normal(ks[2], (B, Q, K + 1), jnp.float32)
    aux_masks = jax.random.normal(ks[3], (B, Q, H, W), jnp.float32)

    targets = []
    for b in range(B):
        labels = jax.random.randint(ks[4 + b], (NT,), 0, K, dtype=jnp.int32)
        masks = (jax.random.uniform(ks[6 + b], (NT, Ht, Wt)) > 0.5).astype(jnp.float32)
        targets.append({"labels": labels, "masks": masks})

    up_out = jax.random.normal(ks[8], (B, 4, 16, 16), jnp.float32)   # NCHW
    up_tgt = jax.random.normal(ks[9], (B, 4, 16, 16), jnp.float32)

    outputs = {
        "pred_logits": pred_logits,
        "pred_masks": pred_masks,
        "aux_outputs": [{"pred_logits": aux_logits, "pred_masks": aux_masks}],
        "upsampling_outputs": [up_out],
    }
    upsampling_targets = [up_tgt]

    criterion = SetCriterionMixOracle(
        num_classes=K,
        matcher=oracle_matcher,
        weight_dict={"loss_ce": 1.0, "loss_mask": 5.0, "loss_dice": 5.0},
        eos_coef=0.1,
        losses=["labels", "masks"],
        num_points=1024,
        oversample_ratio=3.0,
        importance_sample_ratio=0.75,
    )

    losses = criterion(outputs, targets, upsampling_targets,
                       temperature=jnp.float32(0.5))
    for v in losses.values():
        jax.block_until_ready(v)
    print("KERNEL_OK")
</pallas_src>

<mosaic_0001>
module attributes {stable_mosaic.version = 11 : i64} {
  func.func @_fused_ce_kernel(%arg0: i32, %arg1: memref<1x16x5xf32, #tpu.memory_space<vmem>>, %arg2: memref<1x16x1xi32, #tpu.memory_space<vmem>>, %arg3: memref<1x5xf32, #tpu.memory_space<vmem>>, %arg4: memref<2xf32, #tpu.memory_space<smem>>, %arg5: memref<2xf32, #tpu.memory_space<smem>>) attributes {dimension_semantics = [#tpu.dimension_semantics<arbitrary>], iteration_bounds = array<i64: 2>, scalar_prefetch = 0 : i64, scratch_operands = 0 : i64, tpu.core_type = #tpu.core_type<tc>, window_params = [{transform_indices = @transform_0, window_bounds = array<i64: 1, 16, 5>}, {transform_indices = @transform_1, window_bounds = array<i64: 1, 16, 1>}, {pipeline_mode = #tpu.pipeline_mode<synchronous>, transform_indices = @transform_2, window_bounds = array<i64: 1, 5>}, {transform_indices = @transform_3, window_bounds = array<i64: 2>}, {transform_indices = @transform_4, window_bounds = array<i64: 2>}]} {
    %c0 = arith.constant 0 : index
    %c0_0 = arith.constant 0 : index
    %c0_1 = arith.constant 0 : index
    %0 = vector.load %arg1[%c0, %c0_0, %c0_1] : memref<1x16x5xf32, #tpu.memory_space<vmem>>, vector<1x16x5xf32>
    %1 = vector.shape_cast %0 : vector<1x16x5xf32> to vector<16x5xf32>
    %c0_2 = arith.constant 0 : index
    %c0_3 = arith.constant 0 : index
    %c0_4 = arith.constant 0 : index
    %2 = vector.load %arg2[%c0_2, %c0_3, %c0_4] : memref<1x16x1xi32, #tpu.memory_space<vmem>>, vector<1x16x1xi32>
    %3 = vector.shape_cast %2 : vector<1x16x1xi32> to vector<16x1xi32>
    %c0_5 = arith.constant 0 : index
    %c0_6 = arith.constant 0 : index
    %4 = vector.load %arg3[%c0_5, %c0_6] : memref<1x5xf32, #tpu.memory_space<vmem>>, vector<1x5xf32>
    %cst = arith.constant dense<0xFF800000> : vector<16xf32>
    %5 = vector.multi_reduction <maximumf>, %1, %cst [1] : vector<16x5xf32> to vector<16xf32>
    %6 = vector.shape_cast %5 : vector<16xf32> to vector<16x1xf32>
    %7 = vector.broadcast %6 : vector<16x1xf32> to vector<16x5xf32>
    %8 = arith.subf %1, %7 : vector<16x5xf32>
    %9 = math.exp %8 : vector<16x5xf32>
    %cst_7 = arith.constant dense<0.000000e+00> : vector<16xf32>
    %10 = vector.multi_reduction <add>, %9, %cst_7 [1] : vector<16x5xf32> to vector<16xf32>
    %11 = vector.shape_cast %10 : vector<16xf32> to vector<16x1xf32>
    %12 = math.log %11 : vector<16x1xf32>
    %13 = arith.addf %6, %12 : vector<16x1xf32>
    %14 = tpu.iota {dimensions = array<i32: 1>} : vector<16x5xi32>
    %15 = vector.broadcast %3 : vector<16x1xi32> to vector<16x5xi32>
    %16 = arith.cmpi eq, %14, %15 : vector<16x5xi32>
    %17 = arith.extui %16 : vector<16x5xi1> to vector<16x5xi32>
    %18 = arith.sitofp %17 : vector<16x5xi32> to vector<16x5xf32>
    %19 = arith.mulf %1, %18 : vector<16x5xf32>
    %cst_8 = arith.constant dense<0.000000e+00> : vector<16xf32>
    %20 = vector.multi_reduction <add>, %19, %cst_8 [1] : vector<16x5xf32> to vector<16xf32>
    %21 = vector.shape_cast %20 : vector<16xf32> to vector<16x1xf32>
    %22 = vector.broadcast %4 : vector<1x5xf32> to vector<16x5xf32>
    %23 = arith.mulf %22, %18 : vector<16x5xf32>
    %cst_9 = arith.constant dense<0.000000e+00> : vector<16xf32>
    %24 = vector.multi_reduction <add>, %23, %cst_9 [1] : vector<16x5xf32> to vector<16xf32>
    %25 = vector.shape_cast %24 : vector<16xf32> to vector<16x1xf32>
    %26 = arith.subf %13, %21 : vector<16x1xf32>
    %27 = arith.mulf %26, %25 : vector<16x1xf32>
    %28 = vector.shape_cast %27 : vector<16x1xf32> to vector<1x16x1xf32>
    %cst_10 = arith.constant dense<0.000000e+00> : vector<1xf32>
    %29 = vector.multi_reduction <add>, %28, %cst_10 [1, 2] : vector<1x16x1xf32> to vector<1xf32>
    %30 = vector.shape_cast %29 : vector<1xf32> to vector<1x1x1xf32>
    %31 = vector.extract %30[0, 0, 0] : f32 from vector<1x1x1xf32>
    %32 = arith.index_cast %arg0 : i32 to index
    %33 = memref.load %arg4[%32] : memref<2xf32, #tpu.memory_space<smem>>
    memref.store %31, %arg4[%32] : memref<2xf32, #tpu.memory_space<smem>>
    %34 = vector.shape_cast %25 : vector<16x1xf32> to vector<1x16x1xf32>
    %cst_11 = arith.constant dense<0.000000e+00> : vector<1xf32>
    %35 = vector.multi_reduction <add>, %34, %cst_11 [1, 2] : vector<1x16x1xf32> to vector<1xf32>
    %36 = vector.shape_cast %35 : vector<1xf32> to vector<1x1x1xf32>
    %37 = vector.extract %36[0, 0, 0] : f32 from vector<1x1x1xf32>
    %38 = arith.index_cast %arg0 : i32 to index
    %39 = memref.load %arg5[%38] : memref<2xf32, #tpu.memory_space<smem>>
    memref.store %37, %arg5[%38] : memref<2xf32, #tpu.memory_space<smem>>
    return
  }
  func.func @transform_0(%arg0: i32) -> (i32, i32, i32) {
    %c0_i32 = arith.constant 0 : i32
    %c0_i32_0 = arith.constant 0 : i32
    %c0_i32_1 = arith.constant 0 : i32
    return %arg0, %c0_i32, %c0_i32_0 : i32, i32, i32
  }
  func.func @transform_1(%arg0: i32) -> (i32, i32, i32) {
    %c0_i32 = arith.constant 0 : i32
    %c0_i32_0 = arith.constant 0 : i32
    %c0_i32_1 = arith.constant 0 : i32
    return %arg0, %c0_i32, %c0_i32_0 : i32, i32, i32
  }
  func.func @transform_2(%arg0: i32) -> (i32, i32) {
    %c0_i32 = arith.constant 0 : i32
    %c0_i32_0 = arith.constant 0 : i32
    %c0_i32_1 = arith.constant 0 : i32
    return %c0_i32, %c0_i32_0 : i32, i32
  }
  func.func @transform_3(%arg0: i32) -> i32 {
    %c0_i32 = arith.constant 0 : i32
    %c0_i32_0 = arith.constant 0 : i32
    return %c0_i32 : i32
  }
  func.func @transform_4(%arg0: i32) -> i32 {
    %c0_i32 = arith.constant 0 : i32
    %c0_i32_0 = arith.constant 0 : i32
    return %c0_i32 : i32
  }
}

</mosaic_0001>

<llo_original>
// kernel: tpu_custom_call.1
$region0: #{tpu_custom_call.1}
  #allocation0 [shape = 'u32[]', space=smem, size = 0x4, offset = 0x4, fixed_abs, tag = 'smem constant byte address 0x4 - core index']
  #allocation1 [shape = 'u32[144,128]{1,0:T(1,128)}', space=vmem, size = 0x12000, scoped, tag = 'internal scratch']
  %s0 = inlined_call_operand.vmem [shape: f32[2,16,5], index: 0, kind: input, shape index: {}]
  %s1 = inlined_call_operand.vmem [shape: s32[2,16,1], index: 1, kind: input, shape index: {}]
  %s2 = inlined_call_operand.vmem [shape: f32[1,5], index: 2, kind: input, shape index: {}]
  %s3 = inlined_call_operand.hbm [shape: f32[2], index: 3, kind: output, shape index: {0}]
  %s4 = inlined_call_operand.hbm [shape: f32[2], index: 4, kind: output, shape index: {1}]
  %5 = xla_tuple %s3, %s4
  %s6 = sld [smem:[#allocation0]]
  $region53: #{tpu_custom_call.1} parent=0
    _
  %s8 = ssub.s32 1, %s6
  %s9 = scalar_select 0, %s8, %s6
  $region1: #{tpu_custom_call.1} parent=0
    #allocation2 [shape = 'u8[512]{0}', space=smem, size = 0x200, scoped, tag = 'output window, operand 0, single buffered']
    #allocation3 [shape = 's32[2]{0}', space=sflag, size = 0x8, scoped, tag = 'scoped memory for tpu_custom_call.1']
    #allocation4 [shape = 'u8[512]{0}', space=smem, size = 0x200, scoped, tag = 'output window, operand 1, single buffered']
    #allocation5 [shape = 's32[1]{0}', space=sflag, size = 0x4, scoped, tag = 'scoped memory for tpu_custom_call.1']
    %10 = vsyncpa [#allocation3], 0
    %11 = vsyncpa [#allocation5], 0
    loop: start=0, step=1, limit=4
    $region2: #{tpu_custom_call.1} parent=1 // loop_pre_header
      _
    $region3: #{tpu_custom_call.1} parent=1 // loop_header
      %s13 = sphi 0, %s17
      %p14 = scmp.ge.s32.totalorder %s13, 4
      %s23 = sphi 0, %s25
      %s26 = sphi 0, %s23
      %s27 = sphi 0, %s26
      %s43 = sphi 0, %s27
      %s49 = sphi 0, %s51
      %s52 = sphi 0, %s49
      %s53 = sphi 0, %s52
      %s69 = sphi 0, %s53
      %s73 = sphi 0, %s73
      %s75 = sphi 0, %s73
      %s76 = sphi 0, %s75
      %s90 = sphi 0, %s76
      %s94 = sphi 0, %s94
      %s96 = sphi 0, %s94
      %s97 = sphi 0, %s96
      %s111 = sphi 0, %s97
      %s115 = sphi 0, %s115
      %s117 = sphi 0, %s115
      %s118 = sphi 0, %s117
      %s132 = sphi 0, %s118
    $region4: #{tpu_custom_call.1} parent=1 // loop_header_branch
      %16 = sbr.rel (%p14) target = $region8
    $region5: #{tpu_custom_call.1} parent=1 // loop_body
      %s18 = ssub.s32 %s13, 1
      %s19 = ssub.s32 %s13, 2
      %s20 = sadd.s32 %s13, 1
      %s21 = ssub.s32 %s13, %s20
      %p22 = scmp.eq.s32.totalorder %s21, 0
      %s24 = sadd.s32 %s23, 1
      %s25 = scalar_select %p22, %s23, %s24
      %p28 = pneg %p22
      %p29 = scmp.eq.s32.totalorder %s13, 1
      %p30 = por %p28, %p29
      %p31 = scmp.ne.s32.totalorder %s23, %s26
      %p32 = scmp.eq.s32.totalorder %s13, 0
      %p33 = por %p31, %p32
      %p34 = scmp.ne.s32.totalorder %s23, %s26
      %p35 = scmp.eq.s32.totalorder %s18, 1
      %p36 = por %p34, %p35
      %p37 = scmp.ne.s32.totalorder %s26, %s27
      %p38 = scmp.eq.s32.totalorder %s18, 0
      %p39 = por %p37, %p38
      %p40 = scmp.ne.s32.totalorder %s26, %s27
      %p41 = scmp.eq.s32.totalorder %s19, 1
      %p42 = por %p40, %p41
      %p44 = scmp.ne.s32.totalorder %s27, %s43
      %p45 = scmp.eq.s32.totalorder %s19, 0
      %p46 = por %p44, %p45
      %s47 = ssub.s32 %s13, %s20
      %p48 = scmp.eq.s32.totalorder %s47, 0
      %s50 = sadd.s32 %s49, 1
      %s51 = scalar_select %p48, %s49, %s50
      %p54 = pneg %p48
      %p55 = scmp.eq.s32.totalorder %s13, 1
      %p56 = por %p54, %p55
      %p57 = scmp.ne.s32.totalorder %s49, %s52
      %p58 = scmp.eq.s32.totalorder %s13, 0
      %p59 = por %p57, %p58
      %p60 = scmp.ne.s32.totalorder %s49, %s52
      %p61 = scmp.eq.s32.totalorder %s18, 1
      %p62 = por %p60, %p61
      %p63 = scmp.ne.s32.totalorder %s52, %s53
      %p64 = scmp.eq.s32.totalorder %s18, 0
      %p65 = por %p63, %p64
      %p66 = scmp.ne.s32.totalorder %s52, %s53
      %p67 = scmp.eq.s32.totalorder %s19, 1
      %p68 = por %p66, %p67
      %p70 = scmp.ne.s32.totalorder %s53, %s69
      %p71 = scmp.eq.s32.totalorder %s19, 0
      %p72 = por %p70, %p71
      %s74 = sadd.s32 %s73, 1
      %p77 = scmp.eq.s32.totalorder %s13, 1
      %p78 = scmp.ne.s32.totalorder %s73, %s75
      %p79 = scmp.eq.s32.totalorder %s13, 0
      %p80 = por %p78, %p79
      %p81 = scmp.ne.s32.totalorder %s73, %s75
      %p82 = scmp.eq.s32.totalorder %s18, 1
      %p83 = por %p81, %p82
      %p84 = scmp.ne.s32.totalorder %s75, %s76
      %p85 = scmp.eq.s32.totalorder %s18, 0
      %p86 = por %p84, %p85
      %p87 = scmp.ne.s32.totalorder %s75, %s76
      %p88 = scmp.eq.s32.totalorder %s19, 1
      %p89 = por %p87, %p88
      %p91 = scmp.ne.s32.totalorder %s76, %s90
      %p92 = scmp.eq.s32.totalorder %s19, 0
      %p93 = por %p91, %p92
      %s95 = sadd.s32 %s94, 1
      %p98 = scmp.eq.s32.totalorder %s13, 1
      %p99 = scmp.ne.s32.totalorder %s94, %s96
      %p100 = scmp.eq.s32.totalorder %s13, 0
      %p101 = por %p99, %p100
      %p102 = scmp.ne.s32.totalorder %s94, %s96
      %p103 = scmp.eq.s32.totalorder %s18, 1
      %p104 = por %p102, %p103
      %p105 = scmp.ne.s32.totalorder %s96, %s97
      %p106 = scmp.eq.s32.totalorder %s18, 0
      %p107 = por %p105, %p106
      %p108 = scmp.ne.s32.totalorder %s96, %s97
      %p109 = scmp.eq.s32.totalorder %s19, 1
      %p110 = por %p108, %p109
      %p112 = scmp.ne.s32.totalorder %s97, %s111
      %p113 = scmp.eq.s32.totalorder %s19, 0
      %p114 = por %p112, %p113
      %s116 = sadd.s32 %s115, 1
      %p119 = scmp.eq.s32.totalorder %s13, 1
      %p120 = scmp.ne.s32.totalorder %s115, %s117
      %p121 = scmp.eq.s32.totalorder %s13, 0
      %p122 = por %p120, %p121
      %p123 = scmp.ne.s32.totalorder %s115, %s117
      %p124 = scmp.eq.s32.totalorder %s18, 1
      %p125 = por %p123, %p124
      %p126 = scmp.ne.s32.totalorder %s117, %s118
      %p127 = scmp.eq.s32.totalorder %s18, 0
      %p128 = por %p126, %p127
      %p129 = scmp.ne.s32.totalorder %s117, %s118
      %p130 = scmp.eq.s32.totalorder %s19, 1
      %p131 = por %p129, %p130
      %p133 = scmp.ne.s32.totalorder %s118, %s132
      %p134 = scmp.eq.s32.totalorder %s19, 0
      %p135 = por %p133, %p134
      %p136 = scmp.le.s32.totalorder 1, %s13
      %p137 = scmp.lt.s32.totalorder %s13, 3
      %p138 = pnand %p136, %p137
      %p139 = pneg %p138
      // Predicated region
      $region9: #{tpu_custom_call.1} parent=5 // pred_check
        _
      $region10: #{tpu_custom_call.1} parent=5 // pred_check_branch
        %141 = sbr.rel (%p138) target = $region12
      $region11: #{tpu_custom_call.1} parent=5 // pred_region
        %s142 = ssub.s32 %s13, 1
        // Predicated region
        $region13: #{tpu_custom_call.1} parent=11 // pred_check
          %p143 = pneg %p86
        $region14: #{tpu_custom_call.1} parent=11 // pred_check_branch
          %145 = sbr.rel (%p143) target = $region16
        $region15: #{tpu_custom_call.1} parent=11 // pred_region
          _
        $region16: #{tpu_custom_call.1} parent=11 // pred_fallthru
          _
      $region12: #{tpu_custom_call.1} parent=5 // pred_fallthru
        _
      %p146 = scmp.lt.s32.totalorder %s13, 2
      // Predicated region
      $region17: #{tpu_custom_call.1} parent=5 // pred_check
        %p147 = pneg %p146
      $region18: #{tpu_custom_call.1} parent=5 // pred_check_branch
        %149 = sbr.rel (%p147) target = $region20
      $region19: #{tpu_custom_call.1} parent=5 // pred_region
        // Predicated region
        $region21: #{tpu_custom_call.1} parent=19 // pred_check
          %p150 = pneg %p33
        $region22: #{tpu_custom_call.1} parent=19 // pred_check_branch
          %152 = sbr.rel (%p150) target = $region24
        $region23: #{tpu_custom_call.1} parent=19 // pred_region
          %p153 = scmp.lt.s32.totalorder %s13, 1
          %s154 = scalar_select %p153, %s13, 1
          %s155 = smul.addr %s154, 2
          %s156 = smul.addr %s155, 8
          %s157 = scalar_lea.vmem %s0, %s156
        $region24: #{tpu_custom_call.1} parent=19 // pred_fallthru
          _
        // Predicated region
        $region25: #{tpu_custom_call.1} parent=19 // pred_check
          %p158 = pneg %p59
        $region26: #{tpu_custom_call.1} parent=19 // pred_check_branch
          %160 = sbr.rel (%p158) target = $region28
        $region27: #{tpu_custom_call.1} parent=19 // pred_region
          %p161 = scmp.lt.s32.totalorder %s13, 1
          %s162 = scalar_select %p161, %s13, 1
          %s163 = smul.addr %s162, 2
          %s164 = smul.addr %s163, 8
          %s165 = scalar_lea.vmem %s1, %s164
        $region28: #{tpu_custom_call.1} parent=19 // pred_fallthru
          _
      $region20: #{tpu_custom_call.1} parent=5 // pred_fallthru
        _
      %p166 = scmp.le.s32.totalorder 1, %s13
      %p167 = scmp.lt.s32.totalorder %s13, 3
      %p168 = pnand %p166, %p167
      %p169 = pneg %p168
      // Predicated region
      $region29: #{tpu_custom_call.1} parent=5 // pred_check
        _
      $region30: #{tpu_custom_call.1} parent=5 // pred_check_branch
        %171 = sbr.rel (%p168) target = $region32
      $region31: #{tpu_custom_call.1} parent=5 // pred_region
        %s172 = ssub.s32 %s13, 1
        %p173 = scmp.lt.s32.totalorder %s18, 1
        %s174 = scalar_select %p173, %s18, 1
        %s175 = smul.addr %s174, 2
        %s176 = smul.addr %s175, 8
        %s177 = scalar_lea.vmem %s0, %s176
        %p178 = pneg %p39
        %p179 = pneg %p36
        %p180 = scmp.lt.s32.totalorder %s18, 1
        %s181 = scalar_select %p180, %s18, 1
        %s182 = smul.addr %s181, 2
        %s183 = smul.addr %s182, 8
        %s184 = scalar_lea.vmem %s1, %s183
        %p185 = pneg %p65
        %p186 = pneg %p62
        %p187 = pneg %p86
        %p188 = pneg %p83
        %p189 = pneg %p107
        %p190 = pneg %p104
        %p191 = pneg %p128
        %p192 = pneg %p125
        %p193 = scmp.lt.s32.totalorder %s18, 1
        %s194 = scalar_select %p193, %s18, 1
        %s195 = smul.addr %s194, 2
        %s196 = smul.addr %s195, 8
        %s197 = scalar_lea.vmem %s0, %s196
        %p198 = scmp.lt.s32.totalorder %s18, 1
        %s199 = scalar_select %p198, %s18, 1
        %s200 = smul.addr %s199, 2
        %s201 = smul.addr %s200, 8
        %s202 = scalar_lea.vmem %s1, %s201
        %v203 = vld [vmem:[%s197] sm:$0xff]
        %v204 = vld [vmem:[%s197 + $0x8] sm:$0xff]
        %v205 = vld [vmem:[%s202] sm:$0xff]
        %v206 = vld [vmem:[%s202 + $0x8] sm:$0xff]
        %v207 = vld [vmem:[%s2] sm:$0x1]
        %vm208 = vcmask 39936
        %v209 = vsel %vm208, %v203, -inf
        %210 = vmax.xlane.f32.xlu0 %v209
        %v211 = vpop.xlane.xlu0 %210
        %v212 = vsel %vm208, %v204, -inf
        %213 = vmax.xlane.f32.xlu0 %v212
        %v214 = vpop.xlane.xlu0 %213
        %v215 = vsub.f32 %v203, %v211
        %v216 = vsub.f32 %v204, %v214
        %v217 = vmul.f32 %v215, 1.442695
        %v218 = vpow.pop %v217
        %v219 = vmul.f32 %v216, 1.442695
        %v220 = vpow.pop %v219
        %v221 = vsel %vm208, %v218, 0.0
        %222 = vadd.xlane.f32.xlu0 %v221
        %v223 = vpop.xlane.xlu0 %222
        %v224 = vsel %vm208, %v220, 0.0
        %225 = vadd.xlane.f32.xlu0 %v224
        %v226 = vpop.xlane.xlu0 %225
        %v227 = vlog2.pop %v223
        %v228 = vmul.f32 %v227, 0.6931472
        %v229 = vlog2.pop %v226
        %v230 = vmul.f32 %v229, 0.6931472
        %v231 = vadd.f32 %v211, %v228
        %v232 = vadd.f32 %v214, %v230
        %v233 = vlaneseq
        %v234 = vand.u32 %v233, 127
        %235 = vset.pattern.permute.xlu0 0
        %236 = vperm.xlu0 %235, %v205
        %v237 = vpop.permute.xlu0 %236
        %238 = vset.pattern.permute.xlu0 0
        %239 = vperm.xlu0 %238, %v206
        %v240 = vpop.permute.xlu0 %239
        %vm241 = vcmp.eq.s32.totalorder %v234, %v237
        %vm242 = vcmp.eq.s32.totalorder %v234, %v240
        %v243 = vsel %vm241, 1, 0
        %v244 = vsel %vm242, 1, 0
        %v245 = vcvt.s32.f32 %v243
        %v246 = vcvt.s32.f32 %v244
        %v247 = vmul.f32 %v203, %v245
        %v248 = vmul.f32 %v204, %v246
        %v249 = vsel %vm208, %v247, 0.0
        %250 = vadd.xlane.f32.xlu0 %v249
        %v251 = vpop.xlane.xlu0 %250
        %v252 = vsel %vm208, %v248, 0.0
        %253 = vadd.xlane.f32.xlu0 %v252
        %v254 = vpop.xlane.xlu0 %253
        %v256 = vlaneseq
        %v257 = vshrl.u32 %v256, 7
        %v258 = vsub.s32 0, %v257
        %v259 = vrot.slane %v207, %v258
        %v261 = vmul.f32 %v259, %v245
        %v262 = vmul.f32 %v259, %v246
        %v263 = vsel %vm208, %v261, 0.0
        %264 = vadd.xlane.f32.xlu0 %v263
        %v265 = vpop.xlane.xlu0 %264
        %v266 = vsel %vm208, %v262, 0.0
        %267 = vadd.xlane.f32.xlu0 %v266
        %v268 = vpop.xlane.xlu0 %267
        %v269 = vsub.f32 %v231, %v251
        %v270 = vsub.f32 %v232, %v254
        %v271 = vmul.f32 %v269, %v265
        %v272 = vmul.f32 %v270, %v268
        %vm273 = vcmask 7168
        %v274 = vsel %vm273, %v271, 0.0
        %v275 = vsel %vm273, %v272, 0.0
        %v276 = vadd.f32 %v274, %v275
        %277 = vadd.xlane.f32.xlu0 %v276
        %v278 = vpop.xlane.xlu0 %277
        %v279 = vrot.slane %v278, 4
        %v280 = vadd.f32 %v278, %v279
        %v281 = vrot.slane %v280, 2
        %v282 = vadd.f32 %v280, %v281
        %v283 = vrot.slane %v282, 1
        %v284 = vadd.f32 %v282, %v283
        %s285 = vtos %v284
        %s286 = scalar_lea.smem [#allocation2], %s18
        %287 = sst [smem:[%s286]] %s285
        %v288 = vsel %vm273, %v265, 0.0
        %v289 = vsel %vm273, %v268, 0.0
        %v290 = vadd.f32 %v288, %v289
        %291 = vadd.xlane.f32.xlu0 %v290
        %v292 = vpop.xlane.xlu0 %291
        %v293 = vrot.slane %v292, 4
        %v294 = vadd.f32 %v292, %v293
        %v295 = vrot.slane %v294, 2
        %v296 = vadd.f32 %v294, %v295
        %v297 = vrot.slane %v296, 1
        %v298 = vadd.f32 %v296, %v297
        %s299 = vtos %v298
        %s300 = scalar_lea.smem [#allocation4], %s18
        %301 = sst [smem:[%s300]] %s299
        // Predicated region
        $region33: #{tpu_custom_call.1} parent=31 // pred_check
          %p302 = pneg %p104
        $region34: #{tpu_custom_call.1} parent=31 // pred_check_branch
          %304 = sbr.rel (%p302) target = $region36
        $region35: #{tpu_custom_call.1} parent=31 // pred_region
          %s306 = ssub.s32 16, 16
          %307 = vsyncadd [#allocation3], %s306
          %310 = dma.smem_to_hbm [#allocation2], 16, %s3, [#allocation3]
        $region36: #{tpu_custom_call.1} parent=31 // pred_fallthru
          _
        // Predicated region
        $region37: #{tpu_custom_call.1} parent=31 // pred_check
          %p311 = pneg %p125
        $region38: #{tpu_custom_call.1} parent=31 // pred_check_branch
          %313 = sbr.rel (%p311) target = $region40
        $region39: #{tpu_custom_call.1} parent=31 // pred_region
          %s315 = ssub.s32 16, 16
          %316 = vsyncadd [#allocation5], %s315
          %319 = dma.smem_to_hbm [#allocation4], 16, %s4, [#allocation5]
        $region40: #{tpu_custom_call.1} parent=31 // pred_fallthru
          _
        // Predicated region
        $region41: #{tpu_custom_call.1} parent=31 // pred_check
          %p320 = pneg %p104
        $region42: #{tpu_custom_call.1} parent=31 // pred_check_branch
          %322 = sbr.rel (%p320) target = $region44
        $region43: #{tpu_custom_call.1} parent=31 // pred_region
          %323 = dma.done [#allocation3], 16
        $region44: #{tpu_custom_call.1} parent=31 // pred_fallthru
          _
        // Predicated region
        $region45: #{tpu_custom_call.1} parent=31 // pred_check
          %p324 = pneg %p125
        $region46: #{tpu_custom_call.1} parent=31 // pred_check_branch
          %326 = sbr.rel (%p324) target = $region48
        $region47: #{tpu_custom_call.1} parent=31 // pred_region
          %327 = dma.done [#allocation5], 16
        $region48: #{tpu_custom_call.1} parent=31 // pred_fallthru
          _
        %328 = sfence
      $region32: #{tpu_custom_call.1} parent=5 // pred_fallthru
        _
      %p329 = scmp.le.s32.totalorder 2, %s13
      // Predicated region
      $region49: #{tpu_custom_call.1} parent=5 // pred_check
        %p330 = pneg %p329
      $region50: #{tpu_custom_call.1} parent=5 // pred_check_branch
        %332 = sbr.rel (%p330) target = $region52
      $region51: #{tpu_custom_call.1} parent=5 // pred_region
        %s333 = ssub.s32 %s13, 2
      $region52: #{tpu_custom_call.1} parent=5 // pred_fallthru
        _
    $region6: #{tpu_custom_call.1} parent=1 // loop_footer
      %s17 = sadd.s32 1, %s13
    $region7: #{tpu_custom_call.1} parent=1 // loop_footer_branch
      %12 = sbr.rel target = $region3
    $region8: #{tpu_custom_call.1} parent=1 // loop_exit
      _
    %334 = vsyncpa [#allocation3], 1
    %s335 = scalar_lea.sflag [#allocation3], 1
    %336 = vsyncpa %s335, 1
    %337 = vsyncpa [#allocation5], 1

</llo_original>
